<compile_context>
chip_gen: v6e
topology: v6e:2x2x1
jax: 0.10.0
libtpu: 0.0.40
codegen_flags: <defaults>
</compile_context>

<pallas_src>
import functools

import jax
import jax.numpy as jnp
from jax.experimental import pallas as pl
from jax.experimental.pallas import tpu as pltpu


def _round_up(x, m):
    return ((x + m - 1) // m) * m


def _matmul_bias_kernel(x_ref, w_ref, b_ref, o_ref, acc_ref):
    # x_ref: (tm, tk)  w_ref: (tk, tn)  b_ref: (1, tn) f32  o_ref: (tm, tn)
    # acc_ref: (tm, tn) f32 scratch, resident across the K ("arbitrary") axis.
    @pl.when(pl.program_id(2) == 0)
    def _():
        # Seed the accumulator with the broadcast bias: finalize becomes a
        # pure cast/store (no epilogue VPU add).
        acc_ref[...] = jnp.broadcast_to(b_ref[...], acc_ref.shape)

    acc_ref[...] += jnp.dot(
        x_ref[...], w_ref[...], preferred_element_type=jnp.float32
    )

    @pl.when(pl.program_id(2) == pl.num_programs(2) - 1)
    def _():
        o_ref[...] = acc_ref[...].astype(o_ref.dtype)


def pallas_linear(x2d, w_t, b, *, tm=512, tn=512, tk=1024,
                  compute_dtype=jnp.bfloat16, out_dtype=None,
                  vmem_limit_bytes=48 * 1024 * 1024):
    """y = x2d @ w_t + b on the MXU.

    x2d: (M, K), w_t: (K, Nout) (already transposed / pre-cast), b: (Nout,).
    Only K is zero-padded (accumulation correctness); M and N edges are
    handled by Pallas block masking, output is sliced back to Nout.
    """
    M, K = x2d.shape
    Kw, Nout = w_t.shape
    assert K == Kw, "x / weight contraction-dim mismatch"
    if out_dtype is None:
        out_dtype = x2d.dtype

    cdt = jnp.dtype(compute_dtype) if compute_dtype is not None else x2d.dtype
    if x2d.dtype != cdt:
        x2d = x2d.astype(cdt)
    if w_t.dtype != cdt:
        # Weights should arrive pre-cast (init_params); this is a fallback only.
        w_t = w_t.astype(cdt)

    # Dtype-aware sublane multiple: 8 (f32), 16 (bf16), 32 (int8/fp8).
    sub = max(8, (8 * 4) // cdt.itemsize)

    # ---- tile sizes: big MXU-aligned tiles, clamped to the problem ----
    tm = min(tm, _round_up(M, sub))
    if tm > M:
        tm = M                       # full-dim block is always legal
    tk = min(tk, _round_up(K, 128))
    Np = _round_up(Nout, 128)        # lane-dense output slab
    tn = min(tn, Np)

    # v7x has 2 TensorCores: keep >= 2 tiles on at least one "parallel" axis.
    if pl.cdiv(M, tm) == 1 and pl.cdiv(Np, tn) == 1 and Np >= 512:
        tn = _round_up(Np // 2, 256)

    # ---- padding: only K must be zero-padded for a correct reduction ----
    Kp = _round_up(K, tk)
    if Kp != K:
        x2d = jnp.pad(x2d, ((0, 0), (0, Kp - K)))
    if (Kp, Np) != (K, Nout):
        w_t = jnp.pad(w_t, ((0, Kp - K), (0, Np - Nout)))
    b2d = jnp.pad(b.reshape(1, Nout).astype(jnp.float32),
                  ((0, 0), (0, Np - Nout)))

    grid = (pl.cdiv(M, tm), pl.cdiv(Np, tn), Kp // tk)

    # Truthful (advisory) traffic estimate: x re-streamed per N tile,
    # weights re-streamed per M tile.
    x_bytes = M * Kp * cdt.itemsize
    w_bytes = Kp * Np * cdt.itemsize
    o_bytes = M * Np * jnp.dtype(out_dtype).itemsize
    cost = pl.CostEstimate(
        flops=2 * M * K * Nout,
        transcendentals=0,
        bytes_accessed=(x_bytes * grid[1] + w_bytes * grid[0]
                        + o_bytes + 4 * Np * grid[0]),
    )

    y = pl.pallas_call(
        _matmul_bias_kernel,
        out_shape=jax.ShapeDtypeStruct((M, Np), out_dtype),
        grid=grid,
        in_specs=[
            # x tile streams along M and K.
            pl.BlockSpec((tm, tk), lambda i, j, k: (i, k)),
            # weight tile streams along K and N.
            pl.BlockSpec((tk, tn), lambda i, j, k: (k, j)),
            # bias row: constant along M and K.
            pl.BlockSpec((1, tn), lambda i, j, k: (0, j)),
        ],
        out_specs=pl.BlockSpec((tm, tn), lambda i, j, k: (i, j)),
        scratch_shapes=[pltpu.VMEM((tm, tn), jnp.float32)],
        compiler_params=pltpu.CompilerParams(
            dimension_semantics=("parallel", "parallel", "arbitrary"),
            vmem_limit_bytes=vmem_limit_bytes,
        ),
        cost_estimate=cost,
    )(x2d, w_t, b2d)

    return y[:, :Nout] if Np != Nout else y


def linear_projection_forward(x, params, heads, attn_kv=None,
                              compute_dtype=jnp.bfloat16):
    """Replicates LinearProjection.forward.

    x:       (B, N, C)
    attn_kv: optional (N_kv, C); broadcast across batch like the torch code.
    Returns q: (B, heads, N, C//heads), k, v: (B, heads, N_kv, C//heads).
    """
    w_all, b_all = params["w_all"], params["b_all"]   # (C, 3*inner), (3*inner,)
    B, N, C = x.shape
    inner_dim = w_all.shape[1] // 3
    # The torch reshape (…, heads, C//heads) on the projection output implies
    # inner_dim == C; make that requirement explicit.
    assert inner_dim == C, "LinearProjection requires dim == heads * dim_head"
    dh = C // heads

    if attn_kv is None:
        # Fused self-attention path: one kernel, x read from HBM once,
        # lane-dense q|k|v output slab.
        y = pallas_linear(x.reshape(B * N, C), w_all, b_all,
                          compute_dtype=compute_dtype)
        q2d = y[:, :inner_dim]
        k2d = y[:, inner_dim:2 * inner_dim]
        v2d = y[:, 2 * inner_dim:]
        q = q2d.reshape(B, N, heads, dh).transpose(0, 2, 1, 3)
        k = k2d.reshape(B, N, heads, dh).transpose(0, 2, 1, 3)
        v = v2d.reshape(B, N, heads, dh).transpose(0, 2, 1, 3)
    else:
        # Cross-attention: project attn_kv ONCE as (N_kv, C) and broadcast the
        # resulting k/v across batch (all B copies are identical rows).
        N_kv = attn_kv.shape[0]
        q2d = pallas_linear(x.reshape(B * N, C),
                            w_all[:, :inner_dim], b_all[:inner_dim],
                            compute_dtype=compute_dtype)
        kv2d = pallas_linear(attn_kv,
                             w_all[:, inner_dim:], b_all[inner_dim:],
                             compute_dtype=compute_dtype)
        q = q2d.reshape(B, N, heads, dh).transpose(0, 2, 1, 3)
        k1 = kv2d[:, :inner_dim].reshape(N_kv, heads, dh).transpose(1, 0, 2)
        v1 = kv2d[:, inner_dim:].reshape(N_kv, heads, dh).transpose(1, 0, 2)
        k = jnp.broadcast_to(k1[None], (B, heads, N_kv, dh))
        v = jnp.broadcast_to(v1[None], (B, heads, N_kv, dh))
    return q, k, v


def init_params(key, dim, heads, dim_head, compute_dtype=jnp.bfloat16):
    inner_dim = dim_head * heads
    k1, k2, k3, k4 = jax.random.split(key, 4)
    s = 1.0 / jnp.sqrt(dim)
    wq = jax.random.uniform(k1, (inner_dim, dim), jnp.float32, -s, s)
    bq = jax.random.uniform(k2, (inner_dim,), jnp.float32, -s, s)
    wkv = jax.random.uniform(k3, (inner_dim * 2, dim), jnp.float32, -s, s)
    bkv = jax.random.uniform(k4, (inner_dim * 2,), jnp.float32, -s, s)
    w_all = jnp.concatenate([wq.T, wkv.T], axis=1)        # (dim, 3*inner_dim)
    if compute_dtype is not None:
        w_all = w_all.astype(compute_dtype)                # pre-cast ONCE
    return {
        "w_all": w_all,
        "b_all": jnp.concatenate([bq, bkv]),               # (3*inner_dim,) f32
        # f32 torch-layout copies kept only for the pure-JAX reference check.
        "wq": wq, "bq": bq, "wkv": wkv, "bkv": bkv,
    }


def _reference_forward(x, params, heads, attn_kv=None):
    wq, bq, wkv, bkv = params["wq"], params["bq"], params["wkv"], params["bkv"]
    B, N, C = x.shape
    if attn_kv is None:
        attn_kv = x
    else:
        attn_kv = jnp.broadcast_to(attn_kv[None], (B,) + attn_kv.shape)
    N_kv = attn_kv.shape[1]
    dh = C // heads
    q = (x @ wq.T + bq).reshape(B, N, 1, heads, dh).transpose(2, 0, 3, 1, 4)[0]
    kv = (attn_kv @ wkv.T + bkv).reshape(B, N_kv, 2, heads, dh).transpose(2, 0, 3, 1, 4)
    return q, kv[0], kv[1]


if __name__ == "__main__":
    # Small shapes consistent with the module (dim = heads * dim_head).
    B, N = 2, 8
    heads, dim_head = 4, 8
    dim = heads * dim_head  # 32 == C

    key = jax.random.PRNGKey(0)
    kx, kp, kkv = jax.random.split(key, 3)
    x = jax.random.normal(kx, (B, N, dim), dtype=jnp.float32)
    params = init_params(kp, dim, heads, dim_head)

    fwd = jax.jit(functools.partial(linear_projection_forward, heads=heads))

    # bf16 MXU inputs with f32 accumulation vs. the f32 reference: loosen tol.
    TOL = dict(atol=5e-2, rtol=5e-2)

    # Self-attention (fused) path.
    q, k, v = fwd(x, params)
    jax.block_until_ready((q, k, v))
    q_r, k_r, v_r = _reference_forward(x, params, heads)
    assert q.shape == (B, heads, N, dim // heads)
    assert k.shape == (B, heads, N, dim // heads)
    assert v.shape == (B, heads, N, dim // heads)
    assert jnp.allclose(q, q_r, **TOL), "q mismatch"
    assert jnp.allclose(k, k_r, **TOL), "k mismatch"
    assert jnp.allclose(v, v_r, **TOL), "v mismatch"

    # Cross-attention path (non-aligned N_kv exercises the edge-block path).
    N_kv = 6
    attn_kv = jax.random.normal(kkv, (N_kv, dim), dtype=jnp.float32)
    q2, k2, v2 = fwd(x, params, attn_kv=attn_kv)
    jax.block_until_ready((q2, k2, v2))
    q2_r, k2_r, v2_r = _reference_forward(x, params, heads, attn_kv=attn_kv)
    assert k2.shape == (B, heads, N_kv, dim // heads)
    assert jnp.allclose(q2, q2_r, **TOL), "q (cross) mismatch"
    assert jnp.allclose(k2, k2_r, **TOL), "k (cross) mismatch"
    assert jnp.allclose(v2, v2_r, **TOL), "v (cross) mismatch"

    print("KERNEL_OK")
</pallas_src>

<mosaic_0001>
module attributes {stable_mosaic.version = 11 : i64} {
  func.func @_matmul_bias_kernel(%arg0: i32, %arg1: i32, %arg2: i32, %arg3: memref<16x128xbf16, #tpu.memory_space<vmem>>, %arg4: memref<128x128xbf16, #tpu.memory_space<vmem>>, %arg5: memref<1x128xf32, #tpu.memory_space<vmem>>, %arg6: memref<16x128xf32, #tpu.memory_space<vmem>>, %arg7: memref<16x128xf32, #tpu.memory_space<vmem>>) attributes {dimension_semantics = [#tpu.dimension_semantics<parallel>, #tpu.dimension_semantics<parallel>, #tpu.dimension_semantics<arbitrary>], iteration_bounds = array<i64: 1, 1, 1>, scalar_prefetch = 0 : i64, scratch_operands = 1 : i64, tpu.core_type = #tpu.core_type<tc>, window_params = [{transform_indices = @transform_0, window_bounds = array<i64: 16, 128>}, {transform_indices = @transform_1, window_bounds = array<i64: 128, 128>}, {transform_indices = @transform_2, window_bounds = array<i64: 1, 128>}, {transform_indices = @transform_3, window_bounds = array<i64: 16, 128>}]} {
    %c0_i32 = arith.constant 0 : i32
    %0 = arith.cmpi eq, %arg2, %c0_i32 : i32
    %1 = arith.extui %0 : i1 to i32
    %c0_i32_0 = arith.constant 0 : i32
    %2 = arith.cmpi ne, %1, %c0_i32_0 : i32
    scf.if %2 {
      %c0_10 = arith.constant 0 : index
      %c0_11 = arith.constant 0 : index
      %12 = vector.load %arg5[%c0_10, %c0_11] : memref<1x128xf32, #tpu.memory_space<vmem>>, vector<1x128xf32>
      %13 = vector.shape_cast %12 : vector<1x128xf32> to vector<1x128xf32>
      %14 = vector.broadcast %13 : vector<1x128xf32> to vector<16x128xf32>
      %c0_12 = arith.constant 0 : index
      %c0_13 = arith.constant 0 : index
      %15 = vector.load %arg7[%c0_12, %c0_13] : memref<16x128xf32, #tpu.memory_space<vmem>>, vector<16x128xf32>
      tpu.vector_store %arg7[%c0_12, %c0_13], %14 {strides = array<i32>} : memref<16x128xf32, #tpu.memory_space<vmem>>, vector<16x128xf32>,
    } else {
    }
    %c0 = arith.constant 0 : index
    %c0_1 = arith.constant 0 : index
    %3 = vector.load %arg7[%c0, %c0_1] : memref<16x128xf32, #tpu.memory_space<vmem>>, vector<16x128xf32>
    %c0_2 = arith.constant 0 : index
    %c0_3 = arith.constant 0 : index
    %4 = vector.load %arg3[%c0_2, %c0_3] : memref<16x128xbf16, #tpu.memory_space<vmem>>, vector<16x128xbf16>
    %c0_4 = arith.constant 0 : index
    %c0_5 = arith.constant 0 : index
    %5 = vector.load %arg4[%c0_4, %c0_5] : memref<128x128xbf16, #tpu.memory_space<vmem>>, vector<128x128xbf16>
    %cst = arith.constant dense<0.000000e+00> : vector<16x128xf32>
    %6 = tpu.matmul %4, %5, %cst {dimension_numbers = #tpu.dot_dimension_numbers<[1], [0], [0], [1], [0, 0, 1, 1], [], []>} : vector<16x128xbf16>, vector<128x128xbf16>, vector<16x128xf32> -> vector<16x128xf32>
    %7 = arith.addf %3, %6 : vector<16x128xf32>
    %c0_6 = arith.constant 0 : index
    %c0_7 = arith.constant 0 : index
    %8 = vector.load %arg7[%c0_6, %c0_7] : memref<16x128xf32, #tpu.memory_space<vmem>>, vector<16x128xf32>
    tpu.vector_store %arg7[%c0_6, %c0_7], %7 {strides = array<i32>} : memref<16x128xf32, #tpu.memory_space<vmem>>, vector<16x128xf32>,
    %c0_i32_8 = arith.constant 0 : i32
    %9 = arith.cmpi eq, %arg2, %c0_i32_8 : i32
    %10 = arith.extui %9 : i1 to i32
    %c0_i32_9 = arith.constant 0 : i32
    %11 = arith.cmpi ne, %10, %c0_i32_9 : i32
    scf.if %11 {
      %c0_10 = arith.constant 0 : index
      %c0_11 = arith.constant 0 : index
      %12 = vector.load %arg7[%c0_10, %c0_11] : memref<16x128xf32, #tpu.memory_space<vmem>>, vector<16x128xf32>
      %c0_12 = arith.constant 0 : index
      %c0_13 = arith.constant 0 : index
      %13 = vector.load %arg6[%c0_12, %c0_13] : memref<16x128xf32, #tpu.memory_space<vmem>>, vector<16x128xf32>
      tpu.vector_store %arg6[%c0_12, %c0_13], %12 {strides = array<i32>} : memref<16x128xf32, #tpu.memory_space<vmem>>, vector<16x128xf32>,
    } else {
    }
    return
  }
  func.func @transform_0(%arg0: i32, %arg1: i32, %arg2: i32) -> (i32, i32) {
    %c0_i32 = arith.constant 0 : i32
    return %arg0, %arg2 : i32, i32
  }
  func.func @transform_1(%arg0: i32, %arg1: i32, %arg2: i32) -> (i32, i32) {
    %c0_i32 = arith.constant 0 : i32
    return %arg2, %arg1 : i32, i32
  }
  func.func @transform_2(%arg0: i32, %arg1: i32, %arg2: i32) -> (i32, i32) {
    %c0_i32 = arith.constant 0 : i32
    %c0_i32_0 = arith.constant 0 : i32
    return %c0_i32, %arg1 : i32, i32
  }
  func.func @transform_3(%arg0: i32, %arg1: i32, %arg2: i32) -> (i32, i32) {
    %c0_i32 = arith.constant 0 : i32
    return %arg0, %arg1 : i32, i32
  }
}

</mosaic_0001>

<llo_original>
// kernel: linear_projection_forward.1
$region0: #{linear_projection_forward.1}
  #allocation0 [shape = 'u32[]', space=smem, size = 0x4, offset = 0x4, fixed_abs, tag = 'smem constant byte address 0x4 - core index']
  #allocation1 [shape = 'u32[144,128]{1,0:T(1,128)}', space=vmem, size = 0x12000, scoped, tag = 'internal scratch']
  #allocation2 [shape = 'f32[16,128]{1,0:T(8,128)}', space=vmem, size = 0x2000, scoped, tag = 'scratch operand']
  %s0 = inlined_call_operand.vmem [shape: bf16[16,128], index: 0, kind: input, shape index: {}]
  %s1 = inlined_call_operand.vmem [shape: bf16[128,128], index: 1, kind: input, shape index: {}]
  %s2 = inlined_call_operand.vmem [shape: f32[1,128], index: 2, kind: input, shape index: {}]
  %s3 = inlined_call_operand.vmem [shape: f32[16,128], index: 3, kind: output, shape index: {}]
  %s4 = sld [smem:[#allocation0]]
  $region30: #{linear_projection_forward.1} parent=0
    _
  %s6 = ssub.s32 1, %s4
  %s7 = scalar_select 0, %s6, %s4
  // Predicated region
  $region2: #{linear_projection_forward.1} parent=0 // pred_check
    _
  $region3: #{linear_projection_forward.1} parent=0 // pred_check_branch
    %9 = sbr.rel (0) target = $region5
  $region4: #{linear_projection_forward.1} parent=0 // pred_region
    _
  $region5: #{linear_projection_forward.1} parent=0 // pred_fallthru
    _
  // Predicated region
  $region6: #{linear_projection_forward.1} parent=0 // pred_check
    _
  $region7: #{linear_projection_forward.1} parent=0 // pred_check_branch
    %11 = sbr.rel (0) target = $region9
  $region8: #{linear_projection_forward.1} parent=0 // pred_region
    _
  $region9: #{linear_projection_forward.1} parent=0 // pred_fallthru
    _
  // Predicated region
  $region10: #{linear_projection_forward.1} parent=0 // pred_check
    _
  $region11: #{linear_projection_forward.1} parent=0 // pred_check_branch
    %13 = sbr.rel (0) target = $region13
  $region12: #{linear_projection_forward.1} parent=0 // pred_region
    _
  $region13: #{linear_projection_forward.1} parent=0 // pred_fallthru
    _
  %p15 = scmp.eq.s32.totalorder 0, 0
  // Predicated region
  $region14: #{linear_projection_forward.1} parent=0 // pred_check
    %p16 = pneg %p15
  $region15: #{linear_projection_forward.1} parent=0 // pred_check_branch
    %18 = sbr.rel (%p16) target = $region17
  $region16: #{linear_projection_forward.1} parent=0 // pred_region
    %v19 = vld [vmem:[%s2] sm:$0x1]
    %v21 = vlaneseq
    %v22 = vshrl.u32 %v21, 7
    %v23 = vsub.s32 0, %v22
    %v24 = vrot.slane %v19, %v23
    %26 = vst [vmem:[#allocation2] sm:$0xff] %v24
    %27 = vst [vmem:[#allocation2 + $0x8] sm:$0xff] %v24
  $region17: #{linear_projection_forward.1} parent=0 // pred_fallthru
    _
  %v28 = vld [vmem:[#allocation2] sm:$0xff]
  %v29 = vld [vmem:[#allocation2 + $0x8] sm:$0xff]
  %v30 = vld [vmem:[%s0] sm:$0xf]
  %v31 = vld [vmem:[%s0 + $0x4] sm:$0xf]
  %v32 = vld [vmem:[%s1] sm:$0xf]
  %v33 = vld [vmem:[%s1 + $0x4] sm:$0xf]
  %v34 = vld [vmem:[%s1 + $0x8] sm:$0xf]
  %v35 = vld [vmem:[%s1 + $0xc] sm:$0xf]
  %v36 = vld [vmem:[%s1 + $0x10] sm:$0xf]
  %v37 = vld [vmem:[%s1 + $0x14] sm:$0xf]
  %v38 = vld [vmem:[%s1 + $0x18] sm:$0xf]
  %v39 = vld [vmem:[%s1 + $0x1c] sm:$0xf]
  %v40 = vld [vmem:[%s1 + $0x20] sm:$0xf]
  %v41 = vld [vmem:[%s1 + $0x24] sm:$0xf]
  %v42 = vld [vmem:[%s1 + $0x28] sm:$0xf]
  %v43 = vld [vmem:[%s1 + $0x2c] sm:$0xf]
  %v44 = vld [vmem:[%s1 + $0x30] sm:$0xf]
  %v45 = vld [vmem:[%s1 + $0x34] sm:$0xf]
  %v46 = vld [vmem:[%s1 + $0x38] sm:$0xf]
  %v47 = vld [vmem:[%s1 + $0x3c] sm:$0xf]
  %v50 = vunpack.c.l.b16 %v30
  %v51 = vunpack.c.l.b16 %v31
  %v52 = vpack.c.b16 %v51, %v50
  %v70 = vunpack.c.l.b16 %v32
  %v71 = vunpack.c.l.b16 %v33
  %v72 = vunpack.c.l.b16 %v34
  %v73 = vunpack.c.l.b16 %v35
  %v74 = vunpack.c.l.b16 %v36
  %v75 = vunpack.c.l.b16 %v37
  %v76 = vunpack.c.l.b16 %v38
  %v77 = vunpack.c.l.b16 %v39
  %v78 = vunpack.c.l.b16 %v40
  %v79 = vunpack.c.l.b16 %v41
  %v80 = vunpack.c.l.b16 %v42
  %v81 = vunpack.c.l.b16 %v43
  %v82 = vunpack.c.l.b16 %v44
  %v83 = vunpack.c.l.b16 %v45
  %v84 = vunpack.c.l.b16 %v46
  %v85 = vunpack.c.l.b16 %v47
  %v86 = vpack.c.b16 %v71, %v70
  %v87 = vpack.c.b16 %v73, %v72
  %v88 = vpack.c.b16 %v75, %v74
  %v89 = vpack.c.b16 %v77, %v76
  %v90 = vpack.c.b16 %v79, %v78
  %v91 = vpack.c.b16 %v81, %v80
  %v92 = vpack.c.b16 %v83, %v82
  %v93 = vpack.c.b16 %v85, %v84
  %102 = vmatprep.subr.bf16.mxu0 0
  %103 = vmatpush1.bf16.msra.mxu0 %v93
  %104 = vmatprep.subr.bf16.mxu0 0
  %105 = vmatpush1.bf16.msra.mxu0 %v92
  %106 = vmatprep.subr.bf16.mxu0 0
  %107 = vmatpush1.bf16.msra.mxu0 %v91
  %108 = vmatprep.subr.bf16.mxu0 0
  %109 = vmatpush1.bf16.msra.mxu0 %v90
  %110 = vmatprep.subr.bf16.mxu0 0
  %111 = vmatpush1.bf16.msra.mxu0 %v89
  %112 = vmatprep.subr.bf16.mxu0 0
  %113 = vmatpush1.bf16.msra.mxu0 %v88
  %114 = vmatprep.subr.bf16.mxu0 0
  %115 = vmatpush1.bf16.msra.mxu0 %v87
  %116 = vmatprep.subr.bf16.mxu0 0
  %117 = vmatpush1.bf16.msra.mxu0 %v86
  %118 = vmatprep.subr.bf16.mxu0 0
  %119 = vmatpush2.bf16.msra.mxu0 0
  %120 = vmatprep.subr.bf16.mxu0 0
  %121 = vmatpush2.bf16.msra.mxu0 0
  %122 = vmatprep.subr.bf16.mxu0 0
  %123 = vmatpush2.bf16.msra.mxu0 0
  %124 = vmatprep.subr.bf16.mxu0 0
  %125 = vmatpush2.bf16.msra.mxu0 0
  %126 = vmatprep.subr.bf16.mxu0 0
  %127 = vmatpush2.bf16.msra.mxu0 0
  %128 = vmatprep.subr.bf16.mxu0 0
  %129 = vmatpush2.bf16.msra.mxu0 0
  %130 = vmatprep.subr.bf16.mxu0 0
  %131 = vmatpush2.bf16.msra.mxu0 0
  %132 = vmatprep.subr.bf16.mxu0 0
  %133 = vmatpush2.bf16.msra.mxu0 0
  %134 = vmatprep.mubr.bf16.mxu0 0
  %135 = vmatmul.mubr.bf16.gmra.mxu0 %v52
  %v136 = vpop.f32.mrf.mxu0
  %v137 = vadd.f32 0.0, %v136
  %v138 = vpop.f32.mrf.mxu0
  %v139 = vpop.f32.mrf.mxu0
  %v140 = vadd.f32 0.0, %v139
  %v141 = vpop.f32.mrf.mxu0
  %142 = vdwg.mxu0
  %v143 = vadd.f32 %v28, %v137
  %v144 = vadd.f32 %v29, %v140
  %145 = vst [vmem:[#allocation2] sm:$0xff] %v143
  %146 = vst [vmem:[#allocation2 + $0x8] sm:$0xff] %v144
  // Predicated region
  $region18: #{linear_projection_forward.1} parent=0 // pred_check
    %p147 = pneg %p15
  $region19: #{linear_projection_forward.1} parent=0 // pred_check_branch
    %149 = sbr.rel (%p147) target = $region21
  $region20: #{linear_projection_forward.1} parent=0 // pred_region
    %v150 = vld [vmem:[#allocation2] sm:$0xff]
    %v151 = vld [vmem:[#allocation2 + $0x8] sm:$0xff]
    %152 = vst [vmem:[%s3] sm:$0xff] %v150
    %153 = vst [vmem:[%s3 + $0x8] sm:$0xff] %v151
  $region21: #{linear_projection_forward.1} parent=0 // pred_fallthru
    _
  // Predicated region
  $region22: #{linear_projection_forward.1} parent=0 // pred_check
    _
  $region23: #{linear_projection_forward.1} parent=0 // pred_check_branch
    %155 = sbr.rel (0) target = $region25
  $region24: #{linear_projection_forward.1} parent=0 // pred_region
    _
  $region25: #{linear_projection_forward.1} parent=0 // pred_fallthru
    _
  // Predicated region
  $region26: #{linear_projection_forward.1} parent=0 // pred_check
    _
  $region27: #{linear_projection_forward.1} parent=0 // pred_check_branch
    %157 = sbr.rel (0) target = $region29
  $region28: #{linear_projection_forward.1} parent=0 // pred_region
    _
  $region29: #{linear_projection_forward.1} parent=0 // pred_fallthru
    _

</llo_original>
